<compile_context>
chip_gen: v7x
topology: tpu7x:2x2x1
jax: 0.10.0
libtpu: 0.0.40
codegen_flags: <defaults>
</compile_context>

<pallas_src>
import functools

import jax
import jax.numpy as jnp
from jax.experimental import pallas as pl
from jax.experimental.pallas import tpu as pltpu

# Layer dimensions (match torch.nn.Linear(8,6), (6,4), (4,1)).
D_IN, D_H1, D_H2, D_OUT = 8, 6, 4, 1

# Flat offsets into the packed parameter vector (PyTorch (out, in) weight
# orientation, row-major).
_OFF_W1 = 0
_OFF_B1 = _OFF_W1 + D_H1 * D_IN        # 48
_OFF_W2 = _OFF_B1 + D_H1               # 54
_OFF_B2 = _OFF_W2 + D_H2 * D_H1        # 78
_OFF_W3 = _OFF_B2 + D_H2               # 82
_OFF_B3 = _OFF_W3 + D_OUT * D_H2       # 86
N_PARAMS = _OFF_B3 + D_OUT             # 87


def mlp_kernel(p_ref, x_ref, o_ref):
    """Fused 3-layer MLP on one lane-dense batch tile.

    p_ref: f32[N_PARAMS] packed (W1,b1,W2,b2,W3,b3) in SMEM (scalar reads).
    x_ref: f32[8, TILE_B] in VMEM (batch on lanes).
    o_ref: f32[1, TILE_B] in VMEM (lane-dense output slab).
    """

    def dense_sigmoid(rows, w_off, b_off, n_out, n_in):
        # y[j] = sigmoid(sum_i W[j,i] * rows[i] + b[j]); fully unrolled
        # scalar x vector FMAs on the VPU (48 + 24 + 4 multiply-adds total).
        outs = []
        for j in range(n_out):
            acc = rows[0] * p_ref[w_off + j * n_in] + p_ref[b_off + j]
            for i in range(1, n_in):
                acc = acc + rows[i] * p_ref[w_off + j * n_in + i]
            outs.append(jax.nn.sigmoid(acc))  # exp goes to the EUP slot
        return outs

    x_rows = [x_ref[i:i + 1, :] for i in range(D_IN)]   # each (1, TILE_B)
    h1 = dense_sigmoid(x_rows, _OFF_W1, _OFF_B1, D_H1, D_IN)
    h2 = dense_sigmoid(h1, _OFF_W2, _OFF_B2, D_H2, D_H1)
    h3 = dense_sigmoid(h2, _OFF_W3, _OFF_B3, D_OUT, D_H2)
    o_ref[...] = h3[0]


def pack_params(w1, b1, w2, b2, w3, b3):
    """Pack PyTorch-orientation (out, in) weights + biases into one flat f32 vector."""
    flat = jnp.concatenate([w1.ravel(), b1.ravel(),
                            w2.ravel(), b2.ravel(),
                            w3.ravel(), b3.ravel()]).astype(jnp.float32)
    assert flat.shape[0] == N_PARAMS
    return flat


@functools.partial(jax.jit, static_argnames=("tile_b",))
def mlp_forward(x, params_flat, tile_b=8192):
    """x: (B, 8) f32  ->  (B, 1) f32, same semantics as the PyTorch Model."""
    B = x.shape[0]

    # Lane-dense layout: batch -> lane axis.
    x_t = x.astype(jnp.float32).T                       # (8, B)

    # Tile size: large (>=512) for pipelining at big B, but never bigger than
    # the lane-padded batch so tiny batches don't do wasted work.  Always a
    # multiple of 128 (lane width).
    b_lane_padded = ((B + 127) // 128) * 128
    tile = min(tile_b, b_lane_padded)
    b_padded = ((B + tile - 1) // tile) * tile
    if b_padded != B:
        x_t = jnp.pad(x_t, ((0, 0), (0, b_padded - B)))

    grid = (b_padded // tile,)

    out_t = pl.pallas_call(
        mlp_kernel,
        out_shape=jax.ShapeDtypeStruct((1, b_padded), jnp.float32),
        grid=grid,
        in_specs=[
            # All 87 parameters live in SMEM for the whole call (scalar reads).
            pl.BlockSpec(memory_space=pltpu.MemorySpace.SMEM),
            # Lane-dense batch tiles of the transposed input.
            pl.BlockSpec((D_IN, tile), lambda i: (0, i)),
        ],
        out_specs=pl.BlockSpec((1, tile), lambda i: (0, i)),
        compiler_params=pltpu.CompilerParams(
            dimension_semantics=("parallel",),          # megacore / v7x 2-TC
            vmem_limit_bytes=32 * 1024 * 1024,          # portable across v5e/v6e/v7x
        ),
    )(params_flat, x_t)

    # Back to the PyTorch output layout (B, 1), dropping lane padding.
    return out_t[:, :B].T


def init_torch_like_params(key):
    """torch.nn.Linear-style init: W ~ U(-1/sqrt(fan_in), ..), shape (out, in)."""
    dims = [(D_IN, D_H1), (D_H1, D_H2), (D_H2, D_OUT)]
    params = []
    for fan_in, fan_out in dims:
        kw, kb, key = jax.random.split(key, 3)
        bound = 1.0 / float(fan_in) ** 0.5
        W = jax.random.uniform(kw, (fan_out, fan_in), jnp.float32, -bound, bound)
        b = jax.random.uniform(kb, (fan_out,), jnp.float32, -bound, bound)
        params += [W, b]
    return params


def reference_forward(x, w1, b1, w2, b2, w3, b3):
    h = jax.nn.sigmoid(x @ w1.T + b1)
    h = jax.nn.sigmoid(h @ w2.T + b2)
    return jax.nn.sigmoid(h @ w3.T + b3)


if __name__ == "__main__":
    key = jax.random.PRNGKey(0)
    kx, kx2, kp = jax.random.split(key, 3)

    params = init_torch_like_params(kp)
    params_flat = pack_params(*params)

    # Small batch consistent with the original DataLoader-style usage.
    B = 8
    x = jax.random.normal(kx, (B, D_IN), dtype=jnp.float32)
    out = jax.block_until_ready(mlp_forward(x, params_flat))
    ref = reference_forward(x, *params)
    assert out.shape == (B, 1)
    assert jnp.allclose(out, ref, atol=1e-5, rtol=1e-5), "mismatch (small batch)"

    # Larger, non-multiple-of-128 batch exercising the tiled grid + padding path.
    B2 = 1000
    x2 = jax.random.normal(kx2, (B2, D_IN), dtype=jnp.float32)
    out2 = jax.block_until_ready(mlp_forward(x2, params_flat, tile_b=512))
    ref2 = reference_forward(x2, *params)
    assert out2.shape == (B2, 1)
    assert jnp.allclose(out2, ref2, atol=1e-5, rtol=1e-5), "mismatch (tiled batch)"

    print("KERNEL_OK")
</pallas_src>

<mosaic_0001>
module attributes {stable_mosaic.version = 11 : i64} {
  func.func @mlp_kernel(%arg0: i32, %arg1: memref<87xf32, #tpu.memory_space<smem>>, %arg2: memref<8x128xf32, #tpu.memory_space<vmem>>, %arg3: memref<1x128xf32, #tpu.memory_space<vmem>>) attributes {dimension_semantics = [#tpu.dimension_semantics<parallel>], iteration_bounds = array<i64: 1>, scalar_prefetch = 0 : i64, scratch_operands = 0 : i64, tpu.core_type = #tpu.core_type<tc>, window_params = [{transform_indices = @transform_0, window_bounds = array<i64: 87>}, {transform_indices = @transform_1, window_bounds = array<i64: 8, 128>}, {transform_indices = @transform_2, window_bounds = array<i64: 1, 128>}]} {
    %c0 = arith.constant 0 : index
    %c0_0 = arith.constant 0 : index
    %0 = vector.load %arg2[%c0, %c0_0] : memref<8x128xf32, #tpu.memory_space<vmem>>, vector<1x128xf32>
    %c1 = arith.constant 1 : index
    %c0_1 = arith.constant 0 : index
    %1 = vector.load %arg2[%c1, %c0_1] : memref<8x128xf32, #tpu.memory_space<vmem>>, vector<1x128xf32>
    %c2 = arith.constant 2 : index
    %c0_2 = arith.constant 0 : index
    %2 = vector.load %arg2[%c2, %c0_2] : memref<8x128xf32, #tpu.memory_space<vmem>>, vector<1x128xf32>
    %c3 = arith.constant 3 : index
    %c0_3 = arith.constant 0 : index
    %3 = vector.load %arg2[%c3, %c0_3] : memref<8x128xf32, #tpu.memory_space<vmem>>, vector<1x128xf32>
    %c4 = arith.constant 4 : index
    %c0_4 = arith.constant 0 : index
    %4 = vector.load %arg2[%c4, %c0_4] : memref<8x128xf32, #tpu.memory_space<vmem>>, vector<1x128xf32>
    %c5 = arith.constant 5 : index
    %c0_5 = arith.constant 0 : index
    %5 = vector.load %arg2[%c5, %c0_5] : memref<8x128xf32, #tpu.memory_space<vmem>>, vector<1x128xf32>
    %c6 = arith.constant 6 : index
    %c0_6 = arith.constant 0 : index
    %6 = vector.load %arg2[%c6, %c0_6] : memref<8x128xf32, #tpu.memory_space<vmem>>, vector<1x128xf32>
    %c7 = arith.constant 7 : index
    %c0_7 = arith.constant 0 : index
    %7 = vector.load %arg2[%c7, %c0_7] : memref<8x128xf32, #tpu.memory_space<vmem>>, vector<1x128xf32>
    %c0_8 = arith.constant 0 : index
    %8 = memref.load %arg1[%c0_8] : memref<87xf32, #tpu.memory_space<smem>>
    %9 = vector.broadcast %8 : f32 to vector<1x128xf32>
    %10 = arith.mulf %0, %9 : vector<1x128xf32>
    %c48 = arith.constant 48 : index
    %11 = memref.load %arg1[%c48] : memref<87xf32, #tpu.memory_space<smem>>
    %12 = vector.broadcast %11 : f32 to vector<1x128xf32>
    %13 = arith.addf %10, %12 : vector<1x128xf32>
    %c1_9 = arith.constant 1 : index
    %14 = memref.load %arg1[%c1_9] : memref<87xf32, #tpu.memory_space<smem>>
    %15 = vector.broadcast %14 : f32 to vector<1x128xf32>
    %16 = arith.mulf %1, %15 : vector<1x128xf32>
    %17 = arith.addf %13, %16 : vector<1x128xf32>
    %c2_10 = arith.constant 2 : index
    %18 = memref.load %arg1[%c2_10] : memref<87xf32, #tpu.memory_space<smem>>
    %19 = vector.broadcast %18 : f32 to vector<1x128xf32>
    %20 = arith.mulf %2, %19 : vector<1x128xf32>
    %21 = arith.addf %17, %20 : vector<1x128xf32>
    %c3_11 = arith.constant 3 : index
    %22 = memref.load %arg1[%c3_11] : memref<87xf32, #tpu.memory_space<smem>>
    %23 = vector.broadcast %22 : f32 to vector<1x128xf32>
    %24 = arith.mulf %3, %23 : vector<1x128xf32>
    %25 = arith.addf %21, %24 : vector<1x128xf32>
    %c4_12 = arith.constant 4 : index
    %26 = memref.load %arg1[%c4_12] : memref<87xf32, #tpu.memory_space<smem>>
    %27 = vector.broadcast %26 : f32 to vector<1x128xf32>
    %28 = arith.mulf %4, %27 : vector<1x128xf32>
    %29 = arith.addf %25, %28 : vector<1x128xf32>
    %c5_13 = arith.constant 5 : index
    %30 = memref.load %arg1[%c5_13] : memref<87xf32, #tpu.memory_space<smem>>
    %31 = vector.broadcast %30 : f32 to vector<1x128xf32>
    %32 = arith.mulf %5, %31 : vector<1x128xf32>
    %33 = arith.addf %29, %32 : vector<1x128xf32>
    %c6_14 = arith.constant 6 : index
    %34 = memref.load %arg1[%c6_14] : memref<87xf32, #tpu.memory_space<smem>>
    %35 = vector.broadcast %34 : f32 to vector<1x128xf32>
    %36 = arith.mulf %6, %35 : vector<1x128xf32>
    %37 = arith.addf %33, %36 : vector<1x128xf32>
    %c7_15 = arith.constant 7 : index
    %38 = memref.load %arg1[%c7_15] : memref<87xf32, #tpu.memory_space<smem>>
    %39 = vector.broadcast %38 : f32 to vector<1x128xf32>
    %40 = arith.mulf %7, %39 : vector<1x128xf32>
    %41 = arith.addf %37, %40 : vector<1x128xf32>
    %42 = arith.negf %41 : vector<1x128xf32>
    %43 = math.exp %42 : vector<1x128xf32>
    %cst = arith.constant 1.000000e+00 : f32
    %44 = vector.broadcast %cst : f32 to vector<1x128xf32>
    %45 = arith.addf %44, %43 : vector<1x128xf32>
    %46 = arith.divf %44, %45 : vector<1x128xf32>
    %c8 = arith.constant 8 : index
    %47 = memref.load %arg1[%c8] : memref<87xf32, #tpu.memory_space<smem>>
    %48 = vector.broadcast %47 : f32 to vector<1x128xf32>
    %49 = arith.mulf %0, %48 : vector<1x128xf32>
    %c49 = arith.constant 49 : index
    %50 = memref.load %arg1[%c49] : memref<87xf32, #tpu.memory_space<smem>>
    %51 = vector.broadcast %50 : f32 to vector<1x128xf32>
    %52 = arith.addf %49, %51 : vector<1x128xf32>
    %c9 = arith.constant 9 : index
    %53 = memref.load %arg1[%c9] : memref<87xf32, #tpu.memory_space<smem>>
    %54 = vector.broadcast %53 : f32 to vector<1x128xf32>
    %55 = arith.mulf %1, %54 : vector<1x128xf32>
    %56 = arith.addf %52, %55 : vector<1x128xf32>
    %c10 = arith.constant 10 : index
    %57 = memref.load %arg1[%c10] : memref<87xf32, #tpu.memory_space<smem>>
    %58 = vector.broadcast %57 : f32 to vector<1x128xf32>
    %59 = arith.mulf %2, %58 : vector<1x128xf32>
    %60 = arith.addf %56, %59 : vector<1x128xf32>
    %c11 = arith.constant 11 : index
    %61 = memref.load %arg1[%c11] : memref<87xf32, #tpu.memory_space<smem>>
    %62 = vector.broadcast %61 : f32 to vector<1x128xf32>
    %63 = arith.mulf %3, %62 : vector<1x128xf32>
    %64 = arith.addf %60, %63 : vector<1x128xf32>
    %c12 = arith.constant 12 : index
    %65 = memref.load %arg1[%c12] : memref<87xf32, #tpu.memory_space<smem>>
    %66 = vector.broadcast %65 : f32 to vector<1x128xf32>
    %67 = arith.mulf %4, %66 : vector<1x128xf32>
    %68 = arith.addf %64, %67 : vector<1x128xf32>
    %c13 = arith.constant 13 : index
    %69 = memref.load %arg1[%c13] : memref<87xf32, #tpu.memory_space<smem>>
    %70 = vector.broadcast %69 : f32 to vector<1x128xf32>
    %71 = arith.mulf %5, %70 : vector<1x128xf32>
    %72 = arith.addf %68, %71 : vector<1x128xf32>
    %c14 = arith.constant 14 : index
    %73 = memref.load %arg1[%c14] : memref<87xf32, #tpu.memory_space<smem>>
    %74 = vector.broadcast %73 : f32 to vector<1x128xf32>
    %75 = arith.mulf %6, %74 : vector<1x128xf32>
    %76 = arith.addf %72, %75 : vector<1x128xf32>
    %c15 = arith.constant 15 : index
    %77 = memref.load %arg1[%c15] : memref<87xf32, #tpu.memory_space<smem>>
    %78 = vector.broadcast %77 : f32 to vector<1x128xf32>
    %79 = arith.mulf %7, %78 : vector<1x128xf32>
    %80 = arith.addf %76, %79 : vector<1x128xf32>
    %81 = arith.negf %80 : vector<1x128xf32>
    %82 = math.exp %81 : vector<1x128xf32>
    %cst_16 = arith.constant 1.000000e+00 : f32
    %83 = vector.broadcast %cst_16 : f32 to vector<1x128xf32>
    %84 = arith.addf %83, %82 : vector<1x128xf32>
    %85 = arith.divf %83, %84 : vector<1x128xf32>
    %c16 = arith.constant 16 : index
    %86 = memref.load %arg1[%c16] : memref<87xf32, #tpu.memory_space<smem>>
    %87 = vector.broadcast %86 : f32 to vector<1x128xf32>
    %88 = arith.mulf %0, %87 : vector<1x128xf32>
    %c50 = arith.constant 50 : index
    %89 = memref.load %arg1[%c50] : memref<87xf32, #tpu.memory_space<smem>>
    %90 = vector.broadcast %89 : f32 to vector<1x128xf32>
    %91 = arith.addf %88, %90 : vector<1x128xf32>
    %c17 = arith.constant 17 : index
    %92 = memref.load %arg1[%c17] : memref<87xf32, #tpu.memory_space<smem>>
    %93 = vector.broadcast %92 : f32 to vector<1x128xf32>
    %94 = arith.mulf %1, %93 : vector<1x128xf32>
    %95 = arith.addf %91, %94 : vector<1x128xf32>
    %c18 = arith.constant 18 : index
    %96 = memref.load %arg1[%c18] : memref<87xf32, #tpu.memory_space<smem>>
    %97 = vector.broadcast %96 : f32 to vector<1x128xf32>
    %98 = arith.mulf %2, %97 : vector<1x128xf32>
    %99 = arith.addf %95, %98 : vector<1x128xf32>
    %c19 = arith.constant 19 : index
    %100 = memref.load %arg1[%c19] : memref<87xf32, #tpu.memory_space<smem>>
    %101 = vector.broadcast %100 : f32 to vector<1x128xf32>
    %102 = arith.mulf %3, %101 : vector<1x128xf32>
    %103 = arith.addf %99, %102 : vector<1x128xf32>
    %c20 = arith.constant 20 : index
    %104 = memref.load %arg1[%c20] : memref<87xf32, #tpu.memory_space<smem>>
    %105 = vector.broadcast %104 : f32 to vector<1x128xf32>
    %106 = arith.mulf %4, %105 : vector<1x128xf32>
    %107 = arith.addf %103, %106 : vector<1x128xf32>
    %c21 = arith.constant 21 : index
    %108 = memref.load %arg1[%c21] : memref<87xf32, #tpu.memory_space<smem>>
    %109 = vector.broadcast %108 : f32 to vector<1x128xf32>
    %110 = arith.mulf %5, %109 : vector<1x128xf32>
    %111 = arith.addf %107, %110 : vector<1x128xf32>
    %c22 = arith.constant 22 : index
    %112 = memref.load %arg1[%c22] : memref<87xf32, #tpu.memory_space<smem>>
    %113 = vector.broadcast %112 : f32 to vector<1x128xf32>
    %114 = arith.mulf %6, %113 : vector<1x128xf32>
    %115 = arith.addf %111, %114 : vector<1x128xf32>
    %c23 = arith.constant 23 : index
    %116 = memref.load %arg1[%c23] : memref<87xf32, #tpu.memory_space<smem>>
    %117 = vector.broadcast %116 : f32 to vector<1x128xf32>
    %118 = arith.mulf %7, %117 : vector<1x128xf32>
    %119 = arith.addf %115, %118 : vector<1x128xf32>
    %120 = arith.negf %119 : vector<1x128xf32>
    %121 = math.exp %120 : vector<1x128xf32>
    %cst_17 = arith.constant 1.000000e+00 : f32
    %122 = vector.broadcast %cst_17 : f32 to vector<1x128xf32>
    %123 = arith.addf %122, %121 : vector<1x128xf32>
    %124 = arith.divf %122, %123 : vector<1x128xf32>
    %c24 = arith.constant 24 : index
    %125 = memref.load %arg1[%c24] : memref<87xf32, #tpu.memory_space<smem>>
    %126 = vector.broadcast %125 : f32 to vector<1x128xf32>
    %127 = arith.mulf %0, %126 : vector<1x128xf32>
    %c51 = arith.constant 51 : index
    %128 = memref.load %arg1[%c51] : memref<87xf32, #tpu.memory_space<smem>>
    %129 = vector.broadcast %128 : f32 to vector<1x128xf32>
    %130 = arith.addf %127, %129 : vector<1x128xf32>
    %c25 = arith.constant 25 : index
    %131 = memref.load %arg1[%c25] : memref<87xf32, #tpu.memory_space<smem>>
    %132 = vector.broadcast %131 : f32 to vector<1x128xf32>
    %133 = arith.mulf %1, %132 : vector<1x128xf32>
    %134 = arith.addf %130, %133 : vector<1x128xf32>
    %c26 = arith.constant 26 : index
    %135 = memref.load %arg1[%c26] : memref<87xf32, #tpu.memory_space<smem>>
    %136 = vector.broadcast %135 : f32 to vector<1x128xf32>
    %137 = arith.mulf %2, %136 : vector<1x128xf32>
    %138 = arith.addf %134, %137 : vector<1x128xf32>
    %c27 = arith.constant 27 : index
    %139 = memref.load %arg1[%c27] : memref<87xf32, #tpu.memory_space<smem>>
    %140 = vector.broadcast %139 : f32 to vector<1x128xf32>
    %141 = arith.mulf %3, %140 : vector<1x128xf32>
    %142 = arith.addf %138, %141 : vector<1x128xf32>
    %c28 = arith.constant 28 : index
    %143 = memref.load %arg1[%c28] : memref<87xf32, #tpu.memory_space<smem>>
    %144 = vector.broadcast %143 : f32 to vector<1x128xf32>
    %145 = arith.mulf %4, %144 : vector<1x128xf32>
    %146 = arith.addf %142, %145 : vector<1x128xf32>
    %c29 = arith.constant 29 : index
    %147 = memref.load %arg1[%c29] : memref<87xf32, #tpu.memory_space<smem>>
    %148 = vector.broadcast %147 : f32 to vector<1x128xf32>
    %149 = arith.mulf %5, %148 : vector<1x128xf32>
    %150 = arith.addf %146, %149 : vector<1x128xf32>
    %c30 = arith.constant 30 : index
    %151 = memref.load %arg1[%c30] : memref<87xf32, #tpu.memory_space<smem>>
    %152 = vector.broadcast %151 : f32 to vector<1x128xf32>
    %153 = arith.mulf %6, %152 : vector<1x128xf32>
    %154 = arith.addf %150, %153 : vector<1x128xf32>
    %c31 = arith.constant 31 : index
    %155 = memref.load %arg1[%c31] : memref<87xf32, #tpu.memory_space<smem>>
    %156 = vector.broadcast %155 : f32 to vector<1x128xf32>
    %157 = arith.mulf %7, %156 : vector<1x128xf32>
    %158 = arith.addf %154, %157 : vector<1x128xf32>
    %159 = arith.negf %158 : vector<1x128xf32>
    %160 = math.exp %159 : vector<1x128xf32>
    %cst_18 = arith.constant 1.000000e+00 : f32
    %161 = vector.broadcast %cst_18 : f32 to vector<1x128xf32>
    %162 = arith.addf %161, %160 : vector<1x128xf32>
    %163 = arith.divf %161, %162 : vector<1x128xf32>
    %c32 = arith.constant 32 : index
    %164 = memref.load %arg1[%c32] : memref<87xf32, #tpu.memory_space<smem>>
    %165 = vector.broadcast %164 : f32 to vector<1x128xf32>
    %166 = arith.mulf %0, %165 : vector<1x128xf32>
    %c52 = arith.constant 52 : index
    %167 = memref.load %arg1[%c52] : memref<87xf32, #tpu.memory_space<smem>>
    %168 = vector.broadcast %167 : f32 to vector<1x128xf32>
    %169 = arith.addf %166, %168 : vector<1x128xf32>
    %c33 = arith.constant 33 : index
    %170 = memref.load %arg1[%c33] : memref<87xf32, #tpu.memory_space<smem>>
    %171 = vector.broadcast %170 : f32 to vector<1x128xf32>
    %172 = arith.mulf %1, %171 : vector<1x128xf32>
    %173 = arith.addf %169, %172 : vector<1x128xf32>
    %c34 = arith.constant 34 : index
    %174 = memref.load %arg1[%c34] : memref<87xf32, #tpu.memory_space<smem>>
    %175 = vector.broadcast %174 : f32 to vector<1x128xf32>
    %176 = arith.mulf %2, %175 : vector<1x128xf32>
    %177 = arith.addf %173, %176 : vector<1x128xf32>
    %c35 = arith.constant 35 : index
    %178 = memref.load %arg1[%c35] : memref<87xf32, #tpu.memory_space<smem>>
    %179 = vector.broadcast %178 : f32 to vector<1x128xf32>
    %180 = arith.mulf %3, %179 : vector<1x128xf32>
    %181 = arith.addf %177, %180 : vector<1x128xf32>
    %c36 = arith.constant 36 : index
    %182 = memref.load %arg1[%c36] : memref<87xf32, #tpu.memory_space<smem>>
    %183 = vector.broadcast %182 : f32 to vector<1x128xf32>
    %184 = arith.mulf %4, %183 : vector<1x128xf32>
    %185 = arith.addf %181, %184 : vector<1x128xf32>
    %c37 = arith.constant 37 : index
    %186 = memref.load %arg1[%c37] : memref<87xf32, #tpu.memory_space<smem>>
    %187 = vector.broadcast %186 : f32 to vector<1x128xf32>
    %188 = arith.mulf %5, %187 : vector<1x128xf32>
    %189 = arith.addf %185, %188 : vector<1x128xf32>
    %c38 = arith.constant 38 : index
    %190 = memref.load %arg1[%c38] : memref<87xf32, #tpu.memory_space<smem>>
    %191 = vector.broadcast %190 : f32 to vector<1x128xf32>
    %192 = arith.mulf %6, %191 : vector<1x128xf32>
    %193 = arith.addf %189, %192 : vector<1x128xf32>
    %c39 = arith.constant 39 : index
    %194 = memref.load %arg1[%c39] : memref<87xf32, #tpu.memory_space<smem>>
    %195 = vector.broadcast %194 : f32 to vector<1x128xf32>
    %196 = arith.mulf %7, %195 : vector<1x128xf32>
    %197 = arith.addf %193, %196 : vector<1x128xf32>
    %198 = arith.negf %197 : vector<1x128xf32>
    %199 = math.exp %198 : vector<1x128xf32>
    %cst_19 = arith.constant 1.000000e+00 : f32
    %200 = vector.broadcast %cst_19 : f32 to vector<1x128xf32>
    %201 = arith.addf %200, %199 : vector<1x128xf32>
    %202 = arith.divf %200, %201 : vector<1x128xf32>
    %c40 = arith.constant 40 : index
    %203 = memref.load %arg1[%c40] : memref<87xf32, #tpu.memory_space<smem>>
    %204 = vector.broadcast %203 : f32 to vector<1x128xf32>
    %205 = arith.mulf %0, %204 : vector<1x128xf32>
    %c53 = arith.constant 53 : index
    %206 = memref.load %arg1[%c53] : memref<87xf32, #tpu.memory_space<smem>>
    %207 = vector.broadcast %206 : f32 to vector<1x128xf32>
    %208 = arith.addf %205, %207 : vector<1x128xf32>
    %c41 = arith.constant 41 : index
    %209 = memref.load %arg1[%c41] : memref<87xf32, #tpu.memory_space<smem>>
    %210 = vector.broadcast %209 : f32 to vector<1x128xf32>
    %211 = arith.mulf %1, %210 : vector<1x128xf32>
    %212 = arith.addf %208, %211 : vector<1x128xf32>
    %c42 = arith.constant 42 : index
    %213 = memref.load %arg1[%c42] : memref<87xf32, #tpu.memory_space<smem>>
    %214 = vector.broadcast %213 : f32 to vector<1x128xf32>
    %215 = arith.mulf %2, %214 : vector<1x128xf32>
    %216 = arith.addf %212, %215 : vector<1x128xf32>
    %c43 = arith.constant 43 : index
    %217 = memref.load %arg1[%c43] : memref<87xf32, #tpu.memory_space<smem>>
    %218 = vector.broadcast %217 : f32 to vector<1x128xf32>
    %219 = arith.mulf %3, %218 : vector<1x128xf32>
    %220 = arith.addf %216, %219 : vector<1x128xf32>
    %c44 = arith.constant 44 : index
    %221 = memref.load %arg1[%c44] : memref<87xf32, #tpu.memory_space<smem>>
    %222 = vector.broadcast %221 : f32 to vector<1x128xf32>
    %223 = arith.mulf %4, %222 : vector<1x128xf32>
    %224 = arith.addf %220, %223 : vector<1x128xf32>
    %c45 = arith.constant 45 : index
    %225 = memref.load %arg1[%c45] : memref<87xf32, #tpu.memory_space<smem>>
    %226 = vector.broadcast %225 : f32 to vector<1x128xf32>
    %227 = arith.mulf %5, %226 : vector<1x128xf32>
    %228 = arith.addf %224, %227 : vector<1x128xf32>
    %c46 = arith.constant 46 : index
    %229 = memref.load %arg1[%c46] : memref<87xf32, #tpu.memory_space<smem>>
    %230 = vector.broadcast %229 : f32 to vector<1x128xf32>
    %231 = arith.mulf %6, %230 : vector<1x128xf32>
    %232 = arith.addf %228, %231 : vector<1x128xf32>
    %c47 = arith.constant 47 : index
    %233 = memref.load %arg1[%c47] : memref<87xf32, #tpu.memory_space<smem>>
    %234 = vector.broadcast %233 : f32 to vector<1x128xf32>
    %235 = arith.mulf %7, %234 : vector<1x128xf32>
    %236 = arith.addf %232, %235 : vector<1x128xf32>
    %237 = arith.negf %236 : vector<1x128xf32>
    %238 = math.exp %237 : vector<1x128xf32>
    %cst_20 = arith.constant 1.000000e+00 : f32
    %239 = vector.broadcast %cst_20 : f32 to vector<1x128xf32>
    %240 = arith.addf %239, %238 : vector<1x128xf32>
    %241 = arith.divf %239, %240 : vector<1x128xf32>
    %c54 = arith.constant 54 : index
    %242 = memref.load %arg1[%c54] : memref<87xf32, #tpu.memory_space<smem>>
    %243 = vector.broadcast %242 : f32 to vector<1x128xf32>
    %244 = arith.mulf %46, %243 : vector<1x128xf32>
    %c78 = arith.constant 78 : index
    %245 = memref.load %arg1[%c78] : memref<87xf32, #tpu.memory_space<smem>>
    %246 = vector.broadcast %245 : f32 to vector<1x128xf32>
    %247 = arith.addf %244, %246 : vector<1x128xf32>
    %c55 = arith.constant 55 : index
    %248 = memref.load %arg1[%c55] : memref<87xf32, #tpu.memory_space<smem>>
    %249 = vector.broadcast %248 : f32 to vector<1x128xf32>
    %250 = arith.mulf %85, %249 : vector<1x128xf32>
    %251 = arith.addf %247, %250 : vector<1x128xf32>
    %c56 = arith.constant 56 : index
    %252 = memref.load %arg1[%c56] : memref<87xf32, #tpu.memory_space<smem>>
    %253 = vector.broadcast %252 : f32 to vector<1x128xf32>
    %254 = arith.mulf %124, %253 : vector<1x128xf32>
    %255 = arith.addf %251, %254 : vector<1x128xf32>
    %c57 = arith.constant 57 : index
    %256 = memref.load %arg1[%c57] : memref<87xf32, #tpu.memory_space<smem>>
    %257 = vector.broadcast %256 : f32 to vector<1x128xf32>
    %258 = arith.mulf %163, %257 : vector<1x128xf32>
    %259 = arith.addf %255, %258 : vector<1x128xf32>
    %c58 = arith.constant 58 : index
    %260 = memref.load %arg1[%c58] : memref<87xf32, #tpu.memory_space<smem>>
    %261 = vector.broadcast %260 : f32 to vector<1x128xf32>
    %262 = arith.mulf %202, %261 : vector<1x128xf32>
    %263 = arith.addf %259, %262 : vector<1x128xf32>
    %c59 = arith.constant 59 : index
    %264 = memref.load %arg1[%c59] : memref<87xf32, #tpu.memory_space<smem>>
    %265 = vector.broadcast %264 : f32 to vector<1x128xf32>
    %266 = arith.mulf %241, %265 : vector<1x128xf32>
    %267 = arith.addf %263, %266 : vector<1x128xf32>
    %268 = arith.negf %267 : vector<1x128xf32>
    %269 = math.exp %268 : vector<1x128xf32>
    %cst_21 = arith.constant 1.000000e+00 : f32
    %270 = vector.broadcast %cst_21 : f32 to vector<1x128xf32>
    %271 = arith.addf %270, %269 : vector<1x128xf32>
    %272 = arith.divf %270, %271 : vector<1x128xf32>
    %c60 = arith.constant 60 : index
    %273 = memref.load %arg1[%c60] : memref<87xf32, #tpu.memory_space<smem>>
    %274 = vector.broadcast %273 : f32 to vector<1x128xf32>
    %275 = arith.mulf %46, %274 : vector<1x128xf32>
    %c79 = arith.constant 79 : index
    %276 = memref.load %arg1[%c79] : memref<87xf32, #tpu.memory_space<smem>>
    %277 = vector.broadcast %276 : f32 to vector<1x128xf32>
    %278 = arith.addf %275, %277 : vector<1x128xf32>
    %c61 = arith.constant 61 : index
    %279 = memref.load %arg1[%c61] : memref<87xf32, #tpu.memory_space<smem>>
    %280 = vector.broadcast %279 : f32 to vector<1x128xf32>
    %281 = arith.mulf %85, %280 : vector<1x128xf32>
    %282 = arith.addf %278, %281 : vector<1x128xf32>
    %c62 = arith.constant 62 : index
    %283 = memref.load %arg1[%c62] : memref<87xf32, #tpu.memory_space<smem>>
    %284 = vector.broadcast %283 : f32 to vector<1x128xf32>
    %285 = arith.mulf %124, %284 : vector<1x128xf32>
    %286 = arith.addf %282, %285 : vector<1x128xf32>
    %c63 = arith.constant 63 : index
    %287 = memref.load %arg1[%c63] : memref<87xf32, #tpu.memory_space<smem>>
    %288 = vector.broadcast %287 : f32 to vector<1x128xf32>
    %289 = arith.mulf %163, %288 : vector<1x128xf32>
    %290 = arith.addf %286, %289 : vector<1x128xf32>
    %c64 = arith.constant 64 : index
    %291 = memref.load %arg1[%c64] : memref<87xf32, #tpu.memory_space<smem>>
    %292 = vector.broadcast %291 : f32 to vector<1x128xf32>
    %293 = arith.mulf %202, %292 : vector<1x128xf32>
    %294 = arith.addf %290, %293 : vector<1x128xf32>
    %c65 = arith.constant 65 : index
    %295 = memref.load %arg1[%c65] : memref<87xf32, #tpu.memory_space<smem>>
    %296 = vector.broadcast %295 : f32 to vector<1x128xf32>
    %297 = arith.mulf %241, %296 : vector<1x128xf32>
    %298 = arith.addf %294, %297 : vector<1x128xf32>
    %299 = arith.negf %298 : vector<1x128xf32>
    %300 = math.exp %299 : vector<1x128xf32>
    %cst_22 = arith.constant 1.000000e+00 : f32
    %301 = vector.broadcast %cst_22 : f32 to vector<1x128xf32>
    %302 = arith.addf %301, %300 : vector<1x128xf32>
    %303 = arith.divf %301, %302 : vector<1x128xf32>
    %c66 = arith.constant 66 : index
    %304 = memref.load %arg1[%c66] : memref<87xf32, #tpu.memory_space<smem>>
    %305 = vector.broadcast %304 : f32 to vector<1x128xf32>
    %306 = arith.mulf %46, %305 : vector<1x128xf32>
    %c80 = arith.constant 80 : index
    %307 = memref.load %arg1[%c80] : memref<87xf32, #tpu.memory_space<smem>>
    %308 = vector.broadcast %307 : f32 to vector<1x128xf32>
    %309 = arith.addf %306, %308 : vector<1x128xf32>
    %c67 = arith.constant 67 : index
    %310 = memref.load %arg1[%c67] : memref<87xf32, #tpu.memory_space<smem>>
    %311 = vector.broadcast %310 : f32 to vector<1x128xf32>
    %312 = arith.mulf %85, %311 : vector<1x128xf32>
    %313 = arith.addf %309, %312 : vector<1x128xf32>
    %c68 = arith.constant 68 : index
    %314 = memref.load %arg1[%c68] : memref<87xf32, #tpu.memory_space<smem>>
    %315 = vector.broadcast %314 : f32 to vector<1x128xf32>
    %316 = arith.mulf %124, %315 : vector<1x128xf32>
    %317 = arith.addf %313, %316 : vector<1x128xf32>
    %c69 = arith.constant 69 : index
    %318 = memref.load %arg1[%c69] : memref<87xf32, #tpu.memory_space<smem>>
    %319 = vector.broadcast %318 : f32 to vector<1x128xf32>
    %320 = arith.mulf %163, %319 : vector<1x128xf32>
    %321 = arith.addf %317, %320 : vector<1x128xf32>
    %c70 = arith.constant 70 : index
    %322 = memref.load %arg1[%c70] : memref<87xf32, #tpu.memory_space<smem>>
    %323 = vector.broadcast %322 : f32 to vector<1x128xf32>
    %324 = arith.mulf %202, %323 : vector<1x128xf32>
    %325 = arith.addf %321, %324 : vector<1x128xf32>
    %c71 = arith.constant 71 : index
    %326 = memref.load %arg1[%c71] : memref<87xf32, #tpu.memory_space<smem>>
    %327 = vector.broadcast %326 : f32 to vector<1x128xf32>
    %328 = arith.mulf %241, %327 : vector<1x128xf32>
    %329 = arith.addf %325, %328 : vector<1x128xf32>
    %330 = arith.negf %329 : vector<1x128xf32>
    %331 = math.exp %330 : vector<1x128xf32>
    %cst_23 = arith.constant 1.000000e+00 : f32
    %332 = vector.broadcast %cst_23 : f32 to vector<1x128xf32>
    %333 = arith.addf %332, %331 : vector<1x128xf32>
    %334 = arith.divf %332, %333 : vector<1x128xf32>
    %c72 = arith.constant 72 : index
    %335 = memref.load %arg1[%c72] : memref<87xf32, #tpu.memory_space<smem>>
    %336 = vector.broadcast %335 : f32 to vector<1x128xf32>
    %337 = arith.mulf %46, %336 : vector<1x128xf32>
    %c81 = arith.constant 81 : index
    %338 = memref.load %arg1[%c81] : memref<87xf32, #tpu.memory_space<smem>>
    %339 = vector.broadcast %338 : f32 to vector<1x128xf32>
    %340 = arith.addf %337, %339 : vector<1x128xf32>
    %c73 = arith.constant 73 : index
    %341 = memref.load %arg1[%c73] : memref<87xf32, #tpu.memory_space<smem>>
    %342 = vector.broadcast %341 : f32 to vector<1x128xf32>
    %343 = arith.mulf %85, %342 : vector<1x128xf32>
    %344 = arith.addf %340, %343 : vector<1x128xf32>
    %c74 = arith.constant 74 : index
    %345 = memref.load %arg1[%c74] : memref<87xf32, #tpu.memory_space<smem>>
    %346 = vector.broadcast %345 : f32 to vector<1x128xf32>
    %347 = arith.mulf %124, %346 : vector<1x128xf32>
    %348 = arith.addf %344, %347 : vector<1x128xf32>
    %c75 = arith.constant 75 : index
    %349 = memref.load %arg1[%c75] : memref<87xf32, #tpu.memory_space<smem>>
    %350 = vector.broadcast %349 : f32 to vector<1x128xf32>
    %351 = arith.mulf %163, %350 : vector<1x128xf32>
    %352 = arith.addf %348, %351 : vector<1x128xf32>
    %c76 = arith.constant 76 : index
    %353 = memref.load %arg1[%c76] : memref<87xf32, #tpu.memory_space<smem>>
    %354 = vector.broadcast %353 : f32 to vector<1x128xf32>
    %355 = arith.mulf %202, %354 : vector<1x128xf32>
    %356 = arith.addf %352, %355 : vector<1x128xf32>
    %c77 = arith.constant 77 : index
    %357 = memref.load %arg1[%c77] : memref<87xf32, #tpu.memory_space<smem>>
    %358 = vector.broadcast %357 : f32 to vector<1x128xf32>
    %359 = arith.mulf %241, %358 : vector<1x128xf32>
    %360 = arith.addf %356, %359 : vector<1x128xf32>
    %361 = arith.negf %360 : vector<1x128xf32>
    %362 = math.exp %361 : vector<1x128xf32>
    %cst_24 = arith.constant 1.000000e+00 : f32
    %363 = vector.broadcast %cst_24 : f32 to vector<1x128xf32>
    %364 = arith.addf %363, %362 : vector<1x128xf32>
    %365 = arith.divf %363, %364 : vector<1x128xf32>
    %c82 = arith.constant 82 : index
    %366 = memref.load %arg1[%c82] : memref<87xf32, #tpu.memory_space<smem>>
    %367 = vector.broadcast %366 : f32 to vector<1x128xf32>
    %368 = arith.mulf %272, %367 : vector<1x128xf32>
    %c86 = arith.constant 86 : index
    %369 = memref.load %arg1[%c86] : memref<87xf32, #tpu.memory_space<smem>>
    %370 = vector.broadcast %369 : f32 to vector<1x128xf32>
    %371 = arith.addf %368, %370 : vector<1x128xf32>
    %c83 = arith.constant 83 : index
    %372 = memref.load %arg1[%c83] : memref<87xf32, #tpu.memory_space<smem>>
    %373 = vector.broadcast %372 : f32 to vector<1x128xf32>
    %374 = arith.mulf %303, %373 : vector<1x128xf32>
    %375 = arith.addf %371, %374 : vector<1x128xf32>
    %c84 = arith.constant 84 : index
    %376 = memref.load %arg1[%c84] : memref<87xf32, #tpu.memory_space<smem>>
    %377 = vector.broadcast %376 : f32 to vector<1x128xf32>
    %378 = arith.mulf %334, %377 : vector<1x128xf32>
    %379 = arith.addf %375, %378 : vector<1x128xf32>
    %c85 = arith.constant 85 : index
    %380 = memref.load %arg1[%c85] : memref<87xf32, #tpu.memory_space<smem>>
    %381 = vector.broadcast %380 : f32 to vector<1x128xf32>
    %382 = arith.mulf %365, %381 : vector<1x128xf32>
    %383 = arith.addf %379, %382 : vector<1x128xf32>
    %384 = arith.negf %383 : vector<1x128xf32>
    %385 = math.exp %384 : vector<1x128xf32>
    %cst_25 = arith.constant 1.000000e+00 : f32
    %386 = vector.broadcast %cst_25 : f32 to vector<1x128xf32>
    %387 = arith.addf %386, %385 : vector<1x128xf32>
    %388 = arith.divf %386, %387 : vector<1x128xf32>
    %c0_26 = arith.constant 0 : index
    %c0_27 = arith.constant 0 : index
    %389 = vector.load %arg3[%c0_26, %c0_27] : memref<1x128xf32, #tpu.memory_space<vmem>>, vector<1x128xf32>
    tpu.vector_store %arg3[%c0_26, %c0_27], %388 {strides = array<i32>} : memref<1x128xf32, #tpu.memory_space<vmem>>, vector<1x128xf32>,
    return
  }
  func.func @transform_0(%arg0: i32) -> i32 {
    %c0_i32 = arith.constant 0 : i32
    %c0_i32_0 = arith.constant 0 : i32
    return %c0_i32 : i32
  }
  func.func @transform_1(%arg0: i32) -> (i32, i32) {
    %c0_i32 = arith.constant 0 : i32
    %c0_i32_0 = arith.constant 0 : i32
    return %c0_i32, %arg0 : i32, i32
  }
  func.func @transform_2(%arg0: i32) -> (i32, i32) {
    %c0_i32 = arith.constant 0 : i32
    %c0_i32_0 = arith.constant 0 : i32
    return %c0_i32, %arg0 : i32, i32
  }
}

</mosaic_0001>

<llo_original>
// kernel: mlp_forward.1
$region0: #{mlp_forward.1}
  #allocation0 [shape = 'u32[]', space=smem, size = 0x4, offset = 0x4, fixed_abs, tag = 'smem constant byte address 0x4 - core index']
  #allocation1 [shape = 'u32[144,128]{1,0:T(1,128)}', space=vmem, size = 0x12000, scoped, tag = 'internal scratch']
  %s0 = inlined_call_operand.vmem [shape: f32[87], index: 0, kind: input, shape index: {}]
  %s1 = inlined_call_operand.vmem [shape: f32[8,128], index: 1, kind: input, shape index: {}]
  %s2 = inlined_call_operand.vmem [shape: f32[1,128], index: 2, kind: output, shape index: {}]
  %s3 = sld [smem:[#allocation0]]
  $region22: #{mlp_forward.1} parent=0
    _
  %s5 = ssub.s32 1, %s3
  %s6 = scalar_select 0, %s5, %s3
  $region1: #{mlp_forward.1} parent=0
    #allocation2 [shape = 'u8[512]{0}', space=smem, size = 0x200, scoped, tag = 'input window, operand 0, single buffered']
    #allocation3 [shape = 's32[1]{0}', space=sflag, size = 0x4, scoped, tag = 'scoped memory for mlp_forward.1']
    %7 = vsyncpa [#allocation3], 0
    // Predicated region
    $region2: #{mlp_forward.1} parent=1 // pred_check
      _
    $region3: #{mlp_forward.1} parent=1 // pred_check_branch
      %9 = sbr.rel (0) target = $region5
    $region4: #{mlp_forward.1} parent=1 // pred_region
      %s11 = ssub.s32 16, 16
      %12 = vsyncadd [#allocation3], %s11
      %s14 = sshll.u32 %s0, 4
      %s15 = int_to_ptr.vmem [resolvable:$true] %s14
      %17 = dma.vmem_to_smem %s15, 16, [#allocation2], [#allocation3]
    $region5: #{mlp_forward.1} parent=1 // pred_fallthru
      _
    // Predicated region
    $region6: #{mlp_forward.1} parent=1 // pred_check
      _
    $region7: #{mlp_forward.1} parent=1 // pred_check_branch
      %19 = sbr.rel (0) target = $region9
    $region8: #{mlp_forward.1} parent=1 // pred_region
      _
    $region9: #{mlp_forward.1} parent=1 // pred_fallthru
      _
    // Predicated region
    $region10: #{mlp_forward.1} parent=1 // pred_check
      _
    $region11: #{mlp_forward.1} parent=1 // pred_check_branch
      %21 = sbr.rel (0) target = $region13
    $region12: #{mlp_forward.1} parent=1 // pred_region
      %22 = dma.done [#allocation3], 16
    $region13: #{mlp_forward.1} parent=1 // pred_fallthru
      _
    %23 = sfence
    %v24 = vld [vmem:[%s1] sm:$0x1]
    %v25 = vld [vmem:[%s1 + $0x1] sm:$0x1]
    %v26 = vld [vmem:[%s1 + $0x2] sm:$0x1]
    %v27 = vld [vmem:[%s1 + $0x3] sm:$0x1]
    %v28 = vld [vmem:[%s1 + $0x4] sm:$0x1]
    %v29 = vld [vmem:[%s1 + $0x5] sm:$0x1]
    %v30 = vld [vmem:[%s1 + $0x6] sm:$0x1]
    %v31 = vld [vmem:[%s1 + $0x7] sm:$0x1]
    %s32 = sld [smem:[#allocation2]]
    %v33 = vstv %s32
    %v34 = vmul.f32 %v24, %v33
    %s35 = sld [smem:[#allocation2 + $0x30]]
    %v36 = vstv %s35
    %v37 = vadd.f32 %v34, %v36
    %s38 = sld [smem:[#allocation2 + $0x1]]
    %v39 = vstv %s38
    %v40 = vmul.f32 %v25, %v39
    %v41 = vadd.f32 %v37, %v40
    %s42 = sld [smem:[#allocation2 + $0x2]]
    %v43 = vstv %s42
    %v44 = vmul.f32 %v26, %v43
    %v45 = vadd.f32 %v41, %v44
    %s46 = sld [smem:[#allocation2 + $0x3]]
    %v47 = vstv %s46
    %v48 = vmul.f32 %v27, %v47
    %v49 = vadd.f32 %v45, %v48
    %s50 = sld [smem:[#allocation2 + $0x4]]
    %v51 = vstv %s50
    %v52 = vmul.f32 %v28, %v51
    %v53 = vadd.f32 %v49, %v52
    %s54 = sld [smem:[#allocation2 + $0x5]]
    %v55 = vstv %s54
    %v56 = vmul.f32 %v29, %v55
    %v57 = vadd.f32 %v53, %v56
    %s58 = sld [smem:[#allocation2 + $0x6]]
    %v59 = vstv %s58
    %v60 = vmul.f32 %v30, %v59
    %v61 = vadd.f32 %v57, %v60
    %s62 = sld [smem:[#allocation2 + $0x7]]
    %v63 = vstv %s62
    %v64 = vmul.f32 %v31, %v63
    %v65 = vadd.f32 %v61, %v64
    %v66 = vxor.u32 %v65, 2147483648
    %v67 = vmul.f32 %v66, 1.442695
    %v68 = vpow.pop %v67
    %v69 = vadd.f32 %v68, 1.0
    %v70 = vrcp.pop %v69
    %v71 = vmul.f32 1.0, %v70
    %s72 = sld [smem:[#allocation2 + $0x8]]
    %v73 = vstv %s72
    %v74 = vmul.f32 %v24, %v73
    %s75 = sld [smem:[#allocation2 + $0x31]]
    %v76 = vstv %s75
    %v77 = vadd.f32 %v74, %v76
    %s78 = sld [smem:[#allocation2 + $0x9]]
    %v79 = vstv %s78
    %v80 = vmul.f32 %v25, %v79
    %v81 = vadd.f32 %v77, %v80
    %s82 = sld [smem:[#allocation2 + $0xa]]
    %v83 = vstv %s82
    %v84 = vmul.f32 %v26, %v83
    %v85 = vadd.f32 %v81, %v84
    %s86 = sld [smem:[#allocation2 + $0xb]]
    %v87 = vstv %s86
    %v88 = vmul.f32 %v27, %v87
    %v89 = vadd.f32 %v85, %v88
    %s90 = sld [smem:[#allocation2 + $0xc]]
    %v91 = vstv %s90
    %v92 = vmul.f32 %v28, %v91
    %v93 = vadd.f32 %v89, %v92
    %s94 = sld [smem:[#allocation2 + $0xd]]
    %v95 = vstv %s94
    %v96 = vmul.f32 %v29, %v95
    %v97 = vadd.f32 %v93, %v96
    %s98 = sld [smem:[#allocation2 + $0xe]]
    %v99 = vstv %s98
    %v100 = vmul.f32 %v30, %v99
    %v101 = vadd.f32 %v97, %v100
    %s102 = sld [smem:[#allocation2 + $0xf]]
    %v103 = vstv %s102
    %v104 = vmul.f32 %v31, %v103
    %v105 = vadd.f32 %v101, %v104
    %v106 = vxor.u32 %v105, 2147483648
    %v107 = vmul.f32 %v106, 1.442695
    %v108 = vpow.pop %v107
    %v109 = vadd.f32 %v108, 1.0
    %v110 = vrcp.pop %v109
    %v111 = vmul.f32 1.0, %v110
    %s112 = sld [smem:[#allocation2 + $0x10]]
    %v113 = vstv %s112
    %v114 = vmul.f32 %v24, %v113
    %s115 = sld [smem:[#allocation2 + $0x32]]
    %v116 = vstv %s115
    %v117 = vadd.f32 %v114, %v116
    %s118 = sld [smem:[#allocation2 + $0x11]]
    %v119 = vstv %s118
    %v120 = vmul.f32 %v25, %v119
    %v121 = vadd.f32 %v117, %v120
    %s122 = sld [smem:[#allocation2 + $0x12]]
    %v123 = vstv %s122
    %v124 = vmul.f32 %v26, %v123
    %v125 = vadd.f32 %v121, %v124
    %s126 = sld [smem:[#allocation2 + $0x13]]
    %v127 = vstv %s126
    %v128 = vmul.f32 %v27, %v127
    %v129 = vadd.f32 %v125, %v128
    %s130 = sld [smem:[#allocation2 + $0x14]]
    %v131 = vstv %s130
    %v132 = vmul.f32 %v28, %v131
    %v133 = vadd.f32 %v129, %v132
    %s134 = sld [smem:[#allocation2 + $0x15]]
    %v135 = vstv %s134
    %v136 = vmul.f32 %v29, %v135
    %v137 = vadd.f32 %v133, %v136
    %s138 = sld [smem:[#allocation2 + $0x16]]
    %v139 = vstv %s138
    %v140 = vmul.f32 %v30, %v139
    %v141 = vadd.f32 %v137, %v140
    %s142 = sld [smem:[#allocation2 + $0x17]]
    %v143 = vstv %s142
    %v144 = vmul.f32 %v31, %v143
    %v145 = vadd.f32 %v141, %v144
    %v146 = vxor.u32 %v145, 2147483648
    %v147 = vmul.f32 %v146, 1.442695
    %v148 = vpow.pop %v147
    %v149 = vadd.f32 %v148, 1.0
    %v150 = vrcp.pop %v149
    %v151 = vmul.f32 1.0, %v150
    %s152 = sld [smem:[#allocation2 + $0x18]]
    %v153 = vstv %s152
    %v154 = vmul.f32 %v24, %v153
    %s155 = sld [smem:[#allocation2 + $0x33]]
    %v156 = vstv %s155
    %v157 = vadd.f32 %v154, %v156
    %s158 = sld [smem:[#allocation2 + $0x19]]
    %v159 = vstv %s158
    %v160 = vmul.f32 %v25, %v159
    %v161 = vadd.f32 %v157, %v160
    %s162 = sld [smem:[#allocation2 + $0x1a]]
    %v163 = vstv %s162
    %v164 = vmul.f32 %v26, %v163
    %v165 = vadd.f32 %v161, %v164
    %s166 = sld [smem:[#allocation2 + $0x1b]]
    %v167 = vstv %s166
    %v168 = vmul.f32 %v27, %v167
    %v169 = vadd.f32 %v165, %v168
    %s170 = sld [smem:[#allocation2 + $0x1c]]
    %v171 = vstv %s170
    %v172 = vmul.f32 %v28, %v171
    %v173 = vadd.f32 %v169, %v172
    %s174 = sld [smem:[#allocation2 + $0x1d]]
    %v175 = vstv %s174
    %v176 = vmul.f32 %v29, %v175
    %v177 = vadd.f32 %v173, %v176
    %s178 = sld [smem:[#allocation2 + $0x1e]]
    %v179 = vstv %s178
    %v180 = vmul.f32 %v30, %v179
    %v181 = vadd.f32 %v177, %v180
    %s182 = sld [smem:[#allocation2 + $0x1f]]
    %v183 = vstv %s182
    %v184 = vmul.f32 %v31, %v183
    %v185 = vadd.f32 %v181, %v184
    %v186 = vxor.u32 %v185, 2147483648
    %v187 = vmul.f32 %v186, 1.442695
    %v188 = vpow.pop %v187
    %v189 = vadd.f32 %v188, 1.0
    %v190 = vrcp.pop %v189
    %v191 = vmul.f32 1.0, %v190
    %s192 = sld [smem:[#allocation2 + $0x20]]
    %v193 = vstv %s192
    %v194 = vmul.f32 %v24, %v193
    %s195 = sld [smem:[#allocation2 + $0x34]]
    %v196 = vstv %s195
    %v197 = vadd.f32 %v194, %v196
    %s198 = sld [smem:[#allocation2 + $0x21]]
    %v199 = vstv %s198
    %v200 = vmul.f32 %v25, %v199
    %v201 = vadd.f32 %v197, %v200
    %s202 = sld [smem:[#allocation2 + $0x22]]
    %v203 = vstv %s202
    %v204 = vmul.f32 %v26, %v203
    %v205 = vadd.f32 %v201, %v204
    %s206 = sld [smem:[#allocation2 + $0x23]]
    %v207 = vstv %s206
    %v208 = vmul.f32 %v27, %v207
    %v209 = vadd.f32 %v205, %v208
    %s210 = sld [smem:[#allocation2 + $0x24]]
    %v211 = vstv %s210
    %v212 = vmul.f32 %v28, %v211
    %v213 = vadd.f32 %v209, %v212
    %s214 = sld [smem:[#allocation2 + $0x25]]
    %v215 = vstv %s214
    %v216 = vmul.f32 %v29, %v215
    %v217 = vadd.f32 %v213, %v216
    %s218 = sld [smem:[#allocation2 + $0x26]]
    %v219 = vstv %s218
    %v220 = vmul.f32 %v30, %v219
    %v221 = vadd.f32 %v217, %v220
    %s222 = sld [smem:[#allocation2 + $0x27]]
    %v223 = vstv %s222
    %v224 = vmul.f32 %v31, %v223
    %v225 = vadd.f32 %v221, %v224
    %v226 = vxor.u32 %v225, 2147483648
    %v227 = vmul.f32 %v226, 1.442695
    %v228 = vpow.pop %v227
    %v229 = vadd.f32 %v228, 1.0
    %v230 = vrcp.pop %v229
    %v231 = vmul.f32 1.0, %v230
    %s232 = sld [smem:[#allocation2 + $0x28]]
    %v233 = vstv %s232
    %v234 = vmul.f32 %v24, %v233
    %s235 = sld [smem:[#allocation2 + $0x35]]
    %v236 = vstv %s235
    %v237 = vadd.f32 %v234, %v236
    %s238 = sld [smem:[#allocation2 + $0x29]]
    %v239 = vstv %s238
    %v240 = vmul.f32 %v25, %v239
    %v241 = vadd.f32 %v237, %v240
    %s242 = sld [smem:[#allocation2 + $0x2a]]
    %v243 = vstv %s242
    %v244 = vmul.f32 %v26, %v243
    %v245 = vadd.f32 %v241, %v244
    %s246 = sld [smem:[#allocation2 + $0x2b]]
    %v247 = vstv %s246
    %v248 = vmul.f32 %v27, %v247
    %v249 = vadd.f32 %v245, %v248
    %s250 = sld [smem:[#allocation2 + $0x2c]]
    %v251 = vstv %s250
    %v252 = vmul.f32 %v28, %v251
    %v253 = vadd.f32 %v249, %v252
    %s254 = sld [smem:[#allocation2 + $0x2d]]
    %v255 = vstv %s254
    %v256 = vmul.f32 %v29, %v255
    %v257 = vadd.f32 %v253, %v256
    %s258 = sld [smem:[#allocation2 + $0x2e]]
    %v259 = vstv %s258
    %v260 = vmul.f32 %v30, %v259
    %v261 = vadd.f32 %v257, %v260
    %s262 = sld [smem:[#allocation2 + $0x2f]]
    %v263 = vstv %s262
    %v264 = vmul.f32 %v31, %v263
    %v265 = vadd.f32 %v261, %v264
    %v266 = vxor.u32 %v265, 2147483648
    %v267 = vmul.f32 %v266, 1.442695
    %v268 = vpow.pop %v267
    %v269 = vadd.f32 %v268, 1.0
    %v270 = vrcp.pop %v269
    %v271 = vmul.f32 1.0, %v270
    %s272 = sld [smem:[#allocation2 + $0x36]]
    %v273 = vstv %s272
    %v274 = vmul.f32 %v71, %v273
    %s275 = sld [smem:[#allocation2 + $0x4e]]
    %v276 = vstv %s275
    %v277 = vadd.f32 %v274, %v276
    %s278 = sld [smem:[#allocation2 + $0x37]]
    %v279 = vstv %s278
    %v280 = vmul.f32 %v111, %v279
    %v281 = vadd.f32 %v277, %v280
    %s282 = sld [smem:[#allocation2 + $0x38]]
    %v283 = vstv %s282
    %v284 = vmul.f32 %v151, %v283
    %v285 = vadd.f32 %v281, %v284
    %s286 = sld [smem:[#allocation2 + $0x39]]
    %v287 = vstv %s286
    %v288 = vmul.f32 %v191, %v287
    %v289 = vadd.f32 %v285, %v288
    %s290 = sld [smem:[#allocation2 + $0x3a]]
    %v291 = vstv %s290
    %v292 = vmul.f32 %v231, %v291
    %v293 = vadd.f32 %v289, %v292
    %s294 = sld [smem:[#allocation2 + $0x3b]]
    %v295 = vstv %s294
    %v296 = vmul.f32 %v271, %v295
    %v297 = vadd.f32 %v293, %v296
    %v298 = vxor.u32 %v297, 2147483648
    %v299 = vmul.f32 %v298, 1.442695
    %v300 = vpow.pop %v299
    %v301 = vadd.f32 %v300, 1.0
    %v302 = vrcp.pop %v301
    %v303 = vmul.f32 1.0, %v302
    %s304 = sld [smem:[#allocation2 + $0x3c]]
    %v305 = vstv %s304
    %v306 = vmul.f32 %v71, %v305
    %s307 = sld [smem:[#allocation2 + $0x4f]]
    %v308 = vstv %s307
    %v309 = vadd.f32 %v306, %v308
    %s310 = sld [smem:[#allocation2 + $0x3d]]
    %v311 = vstv %s310
    %v312 = vmul.f32 %v111, %v311
    %v313 = vadd.f32 %v309, %v312
    %s314 = sld [smem:[#allocation2 + $0x3e]]
    %v315 = vstv %s314
    %v316 = vmul.f32 %v151, %v315
    %v317 = vadd.f32 %v313, %v316
    %s318 = sld [smem:[#allocation2 + $0x3f]]
    %v319 = vstv %s318
    %v320 = vmul.f32 %v191, %v319
    %v321 = vadd.f32 %v317, %v320
    %s322 = sld [smem:[#allocation2 + $0x40]]
    %v323 = vstv %s322
    %v324 = vmul.f32 %v231, %v323
    %v325 = vadd.f32 %v321, %v324
    %s326 = sld [smem:[#allocation2 + $0x41]]
    %v327 = vstv %s326
    %v328 = vmul.f32 %v271, %v327
    %v329 = vadd.f32 %v325, %v328
    %v330 = vxor.u32 %v329, 2147483648
    %v331 = vmul.f32 %v330, 1.442695
    %v332 = vpow.pop %v331
    %v333 = vadd.f32 %v332, 1.0
    %v334 = vrcp.pop %v333
    %v335 = vmul.f32 1.0, %v334
    %s336 = sld [smem:[#allocation2 + $0x42]]
    %v337 = vstv %s336
    %v338 = vmul.f32 %v71, %v337
    %s339 = sld [smem:[#allocation2 + $0x50]]
    %v340 = vstv %s339
    %v341 = vadd.f32 %v338, %v340
    %s342 = sld [smem:[#allocation2 + $0x43]]
    %v343 = vstv %s342
    %v344 = vmul.f32 %v111, %v343
    %v345 = vadd.f32 %v341, %v344
    %s346 = sld [smem:[#allocation2 + $0x44]]
    %v347 = vstv %s346
    %v348 = vmul.f32 %v151, %v347
    %v349 = vadd.f32 %v345, %v348
    %s350 = sld [smem:[#allocation2 + $0x45]]
    %v351 = vstv %s350
    %v352 = vmul.f32 %v191, %v351
    %v353 = vadd.f32 %v349, %v352
    %s354 = sld [smem:[#allocation2 + $0x46]]
    %v355 = vstv %s354
    %v356 = vmul.f32 %v231, %v355
    %v357 = vadd.f32 %v353, %v356
    %s358 = sld [smem:[#allocation2 + $0x47]]
    %v359 = vstv %s358
    %v360 = vmul.f32 %v271, %v359
    %v361 = vadd.f32 %v357, %v360
    %v362 = vxor.u32 %v361, 2147483648
    %v363 = vmul.f32 %v362, 1.442695
    %v364 = vpow.pop %v363
    %v365 = vadd.f32 %v364, 1.0
    %v366 = vrcp.pop %v365
    %v367 = vmul.f32 1.0, %v366
    %s368 = sld [smem:[#allocation2 + $0x48]]
    %v369 = vstv %s368
    %v370 = vmul.f32 %v71, %v369
    %s371 = sld [smem:[#allocation2 + $0x51]]
    %v372 = vstv %s371
    %v373 = vadd.f32 %v370, %v372
    %s374 = sld [smem:[#allocation2 + $0x49]]
    %v375 = vstv %s374
    %v376 = vmul.f32 %v111, %v375
    %v377 = vadd.f32 %v373, %v376
    %s378 = sld [smem:[#allocation2 + $0x4a]]
    %v379 = vstv %s378
    %v380 = vmul.f32 %v151, %v379
    %v381 = vadd.f32 %v377, %v380
    %s382 = sld [smem:[#allocation2 + $0x4b]]
    %v383 = vstv %s382
    %v384 = vmul.f32 %v191, %v383
    %v385 = vadd.f32 %v381, %v384
    %s386 = sld [smem:[#allocation2 + $0x4c]]
    %v387 = vstv %s386
    %v388 = vmul.f32 %v231, %v387
    %v389 = vadd.f32 %v385, %v388
    %s390 = sld [smem:[#allocation2 + $0x4d]]
    %v391 = vstv %s390
    %v392 = vmul.f32 %v271, %v391
    %v393 = vadd.f32 %v389, %v392
    %v394 = vxor.u32 %v393, 2147483648
    %v395 = vmul.f32 %v394, 1.442695
    %v396 = vpow.pop %v395
    %v397 = vadd.f32 %v396, 1.0
    %v398 = vrcp.pop %v397
    %v399 = vmul.f32 1.0, %v398
    %s400 = sld [smem:[#allocation2 + $0x52]]
    %v401 = vstv %s400
    %v402 = vmul.f32 %v303, %v401
    %s403 = sld [smem:[#allocation2 + $0x56]]
    %v404 = vstv %s403
    %v405 = vadd.f32 %v402, %v404
    %s406 = sld [smem:[#allocation2 + $0x53]]
    %v407 = vstv %s406
    %v408 = vmul.f32 %v335, %v407
    %v409 = vadd.f32 %v405, %v408
    %s410 = sld [smem:[#allocation2 + $0x54]]
    %v411 = vstv %s410
    %v412 = vmul.f32 %v367, %v411
    %v413 = vadd.f32 %v409, %v412
    %s414 = sld [smem:[#allocation2 + $0x55]]
    %v415 = vstv %s414
    %v416 = vmul.f32 %v399, %v415
    %v417 = vadd.f32 %v413, %v416
    %v418 = vxor.u32 %v417, 2147483648
    %v419 = vmul.f32 %v418, 1.442695
    %v420 = vpow.pop %v419
    %v421 = vadd.f32 %v420, 1.0
    %v422 = vrcp.pop %v421
    %v423 = vmul.f32 1.0, %v422
    %424 = vst [vmem:[%s2] sm:$0x1] %v423
    // Predicated region
    $region14: #{mlp_forward.1} parent=1 // pred_check
      _
    $region15: #{mlp_forward.1} parent=1 // pred_check_branch
      %426 = sbr.rel (0) target = $region17
    $region16: #{mlp_forward.1} parent=1 // pred_region
      _
    $region17: #{mlp_forward.1} parent=1 // pred_fallthru
      _
    // Predicated region
    $region18: #{mlp_forward.1} parent=1 // pred_check
      _
    $region19: #{mlp_forward.1} parent=1 // pred_check_branch
      %428 = sbr.rel (0) target = $region21
    $region20: #{mlp_forward.1} parent=1 // pred_region
      _
    $region21: #{mlp_forward.1} parent=1 // pred_fallthru
      _
    %429 = vsyncpa [#allocation3], 1

</llo_original>
